<compile_context>
chip_gen: v7x
topology: tpu7x:2x2x1
jax: 0.10.0
libtpu: 0.0.40
codegen_flags: <defaults>
</compile_context>

<pallas_src>
import functools

import jax
import jax.numpy as jnp
from jax import lax
from jax.experimental import pallas as pl
from jax.experimental.pallas import tpu as pltpu

LANE = 128          # TPU lane width; every feature dim is padded to this.
SUBLANE_BF16 = 16   # batch rows padded to a bf16-packed vreg (16 sublanes).


def actor_kernel(x_ref, w_ref, out_ref, *, state_dim, action_dim):
    """Fused 4-layer MLP forward.

    x_ref:   (B_pad, LANE) f32 — state zero-padded to LANE (no sentinel; injected here).
    w_ref:   (4*LANE, LANE) bf16 — four padded (LANE, LANE) weight blocks with the bias
             folded in as an extra row, plus a ones-sentinel column for layers 1..3 so
             the next layer's bias row keeps firing.
    out_ref: (B_pad, LANE) f32 — only the (first) argmax action per row is non-zero;
             real actions live in columns [0, action_dim).
    """
    col = lax.broadcasted_iota(jnp.int32, x_ref.shape, 1)

    # Inject the 1.0 bias-row sentinel in-kernel (free VPU select) instead of in the
    # wrapper (saves an XLA .at[].set fusion per call).
    x = jnp.where(col == state_dim, 1.0, x_ref[...])
    h = x.astype(jnp.bfloat16)

    # Three hidden Linear(+bias)+ReLU layers (dropout = identity in eval mode).
    for l in range(3):
        w = w_ref[pl.ds(l * LANE, LANE), :]
        h = jnp.dot(h, w, preferred_element_type=jnp.float32)
        h = jnp.maximum(h, 0.0)               # f32 elementwise (v5e-friendly)
        h = h.astype(jnp.bfloat16)            # bf16 only at the MXU input

    # Output layer: Linear + tanh, scaled to [0, 5].
    w4 = w_ref[pl.ds(3 * LANE, LANE), :]
    o = jnp.dot(h, w4, preferred_element_type=jnp.float32)
    scaled = (jnp.tanh(o) + 1.0) * 2.5

    # Keep only the first argmax entry per row among the real action lanes.
    # max reduce + VPU compare instead of an index-carrying argmax reduce;
    # min-of-iota gives strict first-occurrence tie-breaking (torch.argmax semantics).
    valid = col < action_dim
    masked = jnp.where(valid, scaled, -1.0)   # scaled >= 0, so padding never wins
    rowmax = jnp.max(masked, axis=-1, keepdims=True)
    is_max = valid & (scaled == rowmax)
    first_idx = jnp.min(jnp.where(is_max, col, LANE), axis=-1, keepdims=True)
    keep = col == first_idx
    out_ref[...] = jnp.where(keep, scaled, 0.0)


def pack_actor_params(layers):
    """Pack [(W(in,out), b(out,)), ...] into one (4*LANE, LANE) bf16 buffer.

    Each layer becomes a (LANE, LANE) block:
      rows [0, d_in)           : W
      row  d_in                : bias (fired by the 1.0 sentinel in the activation)
      block[d_in, d_out] = 1.0 : sentinel so the NEXT layer's bias row also fires
                                 (omitted for the final layer).
    """
    blocks = []
    n = len(layers)
    for li, (w, b) in enumerate(layers):
        d_in, d_out = w.shape
        assert d_in < LANE and d_out <= LANE
        blk = jnp.zeros((LANE, LANE), jnp.float32)
        blk = blk.at[:d_in, :d_out].set(w)
        blk = blk.at[d_in, :d_out].set(b)
        if li < n - 1:
            assert d_out < LANE
            blk = blk.at[d_in, d_out].set(1.0)
        blocks.append(blk)
    return jnp.concatenate(blocks, axis=0).astype(jnp.bfloat16)


def actor_forward(state, packed_w, *, state_dim, action_dim):
    """Pads to lane/sublane-dense shapes, runs the fused kernel, slices back."""
    squeeze = state.ndim == 1
    if squeeze:
        state = state[None, :]
    B = state.shape[0]
    B_pad = max(SUBLANE_BF16,
                ((B + SUBLANE_BF16 - 1) // SUBLANE_BF16) * SUBLANE_BF16)

    # Single pad op (sentinel column is generated inside the kernel).
    x_pad = jnp.pad(state.astype(jnp.float32),
                    ((0, B_pad - B), (0, LANE - state_dim)))

    vmem = pl.BlockSpec(memory_space=pltpu.MemorySpace.VMEM)
    flops = 2 * B_pad * LANE * LANE * 4
    bytes_accessed = 2 * (B_pad * LANE * 4) + 4 * LANE * LANE * 2
    out = pl.pallas_call(
        functools.partial(actor_kernel, state_dim=state_dim, action_dim=action_dim),
        out_shape=jax.ShapeDtypeStruct((B_pad, LANE), jnp.float32),
        in_specs=[vmem, vmem],
        out_specs=vmem,
        cost_estimate=pl.CostEstimate(flops=flops,
                                      transcendentals=B_pad * LANE,
                                      bytes_accessed=bytes_accessed),
        compiler_params=pltpu.CompilerParams(),
    )(x_pad, packed_w)

    out = out[:B, :action_dim]
    return out[0] if squeeze else out


def init_linear(key, fan_in, fan_out):
    """Deterministic init mimicking nn.Linear's U(-1/sqrt(fan_in), 1/sqrt(fan_in))."""
    kw, kb = jax.random.split(key)
    bound = 1.0 / jnp.sqrt(fan_in)
    # Stored as (in, out) so the kernel computes x @ W (== PyTorch x @ W.T).
    w = jax.random.uniform(kw, (fan_in, fan_out), jnp.float32, -bound, bound)
    b = jax.random.uniform(kb, (fan_out,), jnp.float32, -bound, bound)
    return w, b


if __name__ == "__main__":
    # Small shapes consistent with the module: 5 state features, 5 actions.
    state_dim = 5
    hidden1_size = 32
    hidden2_size = 32
    hidden3_size = 32
    action_vector = 5
    batch = 8

    key = jax.random.PRNGKey(0)
    k_x, k1, k2, k3, k4 = jax.random.split(key, 5)

    state = jax.random.normal(k_x, (batch, state_dim), jnp.float32)

    w1, b1 = init_linear(k1, state_dim, hidden1_size)
    w2, b2 = init_linear(k2, hidden1_size, hidden2_size)
    w3, b3 = init_linear(k3, hidden2_size, hidden3_size)
    w4, b4 = init_linear(k4, hidden3_size, action_vector)

    packed_w = pack_actor_params([(w1, b1), (w2, b2), (w3, b3), (w4, b4)])

    fwd = jax.jit(functools.partial(actor_forward,
                                    state_dim=state_dim,
                                    action_dim=action_vector))
    out = fwd(state, packed_w)
    out = jax.block_until_ready(out)

    # Pure-JAX reference that mirrors the kernel's bf16-at-the-dot numerics.
    def ref_forward(x):
        def q(a):
            return a.astype(jnp.bfloat16).astype(jnp.float32)
        h = q(x)
        for (w, b) in ((w1, b1), (w2, b2), (w3, b3)):
            h = q(jnp.maximum(h @ q(w) + q(b), 0.0))
        s = (jnp.tanh(h @ q(w4) + q(b4)) + 1.0) * 2.5
        idx = jnp.argmax(s, axis=-1)
        m = jax.nn.one_hot(idx, s.shape[-1], dtype=bool)
        return jnp.where(m, s, 0.0)

    ref = ref_forward(state)
    assert out.shape == (batch, action_vector)
    assert jnp.allclose(out, ref, atol=1e-3, rtol=1e-3), (out, ref)
    print("KERNEL_OK")
</pallas_src>

<mosaic_0001>
module attributes {stable_mosaic.version = 11 : i64} {
  func.func @actor_kernel(%arg0: memref<16x128xf32, #tpu.memory_space<vmem>>, %arg1: memref<512x128xbf16, #tpu.memory_space<vmem>>, %arg2: memref<16x128xf32, #tpu.memory_space<vmem>>) attributes {dimension_semantics = [], scalar_prefetch = 0 : i64, scratch_operands = 0 : i64, tpu.core_type = #tpu.core_type<tc>} {
    %0 = tpu.iota {dimensions = array<i32: 1>} : vector<16x128xi32>
    %c5_i32 = arith.constant 5 : i32
    %1 = vector.broadcast %c5_i32 : i32 to vector<16x128xi32>
    %2 = arith.cmpi eq, %0, %1 : vector<16x128xi32>
    %c0 = arith.constant 0 : index
    %c0_0 = arith.constant 0 : index
    %3 = vector.load %arg0[%c0, %c0_0] : memref<16x128xf32, #tpu.memory_space<vmem>>, vector<16x128xf32>
    %cst = arith.constant 1.000000e+00 : f32
    %4 = vector.broadcast %cst : f32 to vector<16x128xf32>
    %5 = arith.select %2, %4, %3 : vector<16x128xi1>, vector<16x128xf32>
    %6 = arith.truncf %5 : vector<16x128xf32> to vector<16x128xbf16>
    %c0_1 = arith.constant 0 : index
    %c0_2 = arith.constant 0 : index
    %7 = vector.load %arg1[%c0_1, %c0_2] : memref<512x128xbf16, #tpu.memory_space<vmem>>, vector<128x128xbf16>
    %cst_3 = arith.constant dense<0.000000e+00> : vector<16x128xf32>
    %8 = tpu.matmul %6, %7, %cst_3 {dimension_numbers = #tpu.dot_dimension_numbers<[1], [0], [0], [1], [0, 0, 1, 1], [], []>} : vector<16x128xbf16>, vector<128x128xbf16>, vector<16x128xf32> -> vector<16x128xf32>
    %cst_4 = arith.constant 0.000000e+00 : f32
    %9 = vector.broadcast %cst_4 : f32 to vector<16x128xf32>
    %10 = arith.maximumf %8, %9 : vector<16x128xf32>
    %11 = arith.truncf %10 : vector<16x128xf32> to vector<16x128xbf16>
    %c128 = arith.constant 128 : index
    %c0_5 = arith.constant 0 : index
    %12 = vector.load %arg1[%c128, %c0_5] : memref<512x128xbf16, #tpu.memory_space<vmem>>, vector<128x128xbf16>
    %cst_6 = arith.constant dense<0.000000e+00> : vector<16x128xf32>
    %13 = tpu.matmul %11, %12, %cst_6 {dimension_numbers = #tpu.dot_dimension_numbers<[1], [0], [0], [1], [0, 0, 1, 1], [], []>} : vector<16x128xbf16>, vector<128x128xbf16>, vector<16x128xf32> -> vector<16x128xf32>
    %cst_7 = arith.constant 0.000000e+00 : f32
    %14 = vector.broadcast %cst_7 : f32 to vector<16x128xf32>
    %15 = arith.maximumf %13, %14 : vector<16x128xf32>
    %16 = arith.truncf %15 : vector<16x128xf32> to vector<16x128xbf16>
    %c256 = arith.constant 256 : index
    %c0_8 = arith.constant 0 : index
    %17 = vector.load %arg1[%c256, %c0_8] : memref<512x128xbf16, #tpu.memory_space<vmem>>, vector<128x128xbf16>
    %cst_9 = arith.constant dense<0.000000e+00> : vector<16x128xf32>
    %18 = tpu.matmul %16, %17, %cst_9 {dimension_numbers = #tpu.dot_dimension_numbers<[1], [0], [0], [1], [0, 0, 1, 1], [], []>} : vector<16x128xbf16>, vector<128x128xbf16>, vector<16x128xf32> -> vector<16x128xf32>
    %cst_10 = arith.constant 0.000000e+00 : f32
    %19 = vector.broadcast %cst_10 : f32 to vector<16x128xf32>
    %20 = arith.maximumf %18, %19 : vector<16x128xf32>
    %21 = arith.truncf %20 : vector<16x128xf32> to vector<16x128xbf16>
    %c384 = arith.constant 384 : index
    %c0_11 = arith.constant 0 : index
    %22 = vector.load %arg1[%c384, %c0_11] : memref<512x128xbf16, #tpu.memory_space<vmem>>, vector<128x128xbf16>
    %cst_12 = arith.constant dense<0.000000e+00> : vector<16x128xf32>
    %23 = tpu.matmul %21, %22, %cst_12 {dimension_numbers = #tpu.dot_dimension_numbers<[1], [0], [0], [1], [0, 0, 1, 1], [], []>} : vector<16x128xbf16>, vector<128x128xbf16>, vector<16x128xf32> -> vector<16x128xf32>
    %24 = math.tanh %23 : vector<16x128xf32>
    %cst_13 = arith.constant 1.000000e+00 : f32
    %25 = vector.broadcast %cst_13 : f32 to vector<16x128xf32>
    %26 = arith.addf %24, %25 : vector<16x128xf32>
    %cst_14 = arith.constant 2.500000e+00 : f32
    %27 = vector.broadcast %cst_14 : f32 to vector<16x128xf32>
    %28 = arith.mulf %26, %27 : vector<16x128xf32>
    %c5_i32_15 = arith.constant 5 : i32
    %29 = vector.broadcast %c5_i32_15 : i32 to vector<16x128xi32>
    %30 = arith.cmpi slt, %0, %29 : vector<16x128xi32>
    %cst_16 = arith.constant -1.000000e+00 : f32
    %31 = vector.broadcast %cst_16 : f32 to vector<16x128xf32>
    %32 = arith.select %30, %28, %31 : vector<16x128xi1>, vector<16x128xf32>
    %cst_17 = arith.constant dense<0xFF800000> : vector<16xf32>
    %33 = vector.multi_reduction <maximumf>, %32, %cst_17 [1] : vector<16x128xf32> to vector<16xf32>
    %34 = vector.shape_cast %33 : vector<16xf32> to vector<16x1xf32>
    %35 = vector.broadcast %34 : vector<16x1xf32> to vector<16x128xf32>
    %36 = arith.cmpf oeq, %28, %35 : vector<16x128xf32>
    %37 = arith.andi %30, %36 : vector<16x128xi1>
    %c128_i32 = arith.constant 128 : i32
    %38 = vector.broadcast %c128_i32 : i32 to vector<16x128xi32>
    %39 = arith.select %37, %0, %38 : vector<16x128xi1>, vector<16x128xi32>
    %cst_18 = arith.constant dense<2147483647> : vector<16xi32>
    %40 = vector.multi_reduction <minsi>, %39, %cst_18 [1] : vector<16x128xi32> to vector<16xi32>
    %41 = vector.shape_cast %40 : vector<16xi32> to vector<16x1xi32>
    %42 = vector.broadcast %41 : vector<16x1xi32> to vector<16x128xi32>
    %43 = arith.cmpi eq, %0, %42 : vector<16x128xi32>
    %cst_19 = arith.constant 0.000000e+00 : f32
    %44 = vector.broadcast %cst_19 : f32 to vector<16x128xf32>
    %45 = arith.select %43, %28, %44 : vector<16x128xi1>, vector<16x128xf32>
    %c0_20 = arith.constant 0 : index
    %c0_21 = arith.constant 0 : index
    %46 = vector.load %arg2[%c0_20, %c0_21] : memref<16x128xf32, #tpu.memory_space<vmem>>, vector<16x128xf32>
    tpu.vector_store %arg2[%c0_20, %c0_21], %45 {strides = array<i32>} : memref<16x128xf32, #tpu.memory_space<vmem>>, vector<16x128xf32>,
    return
  }
}

</mosaic_0001>

<llo_original>
// kernel: actor_forward.1
$region0: #{actor_forward.1}
  #allocation0 [shape = 'u32[]', space=smem, size = 0x4, offset = 0x4, fixed_abs, tag = 'smem constant byte address 0x4 - core index']
  #allocation1 [shape = 'u32[144,128]{1,0:T(1,128)}', space=vmem, size = 0x12000, scoped, tag = 'internal scratch']
  %s0 = inlined_call_operand.vmem [shape: f32[16,128], index: 0, kind: input, shape index: {}]
  %s1 = inlined_call_operand.hbm [shape: bf16[512,128], index: 1, kind: input, shape index: {}]
  %s2 = inlined_call_operand.vmem [shape: f32[16,128], index: 2, kind: output, shape index: {}]
  %s3 = sld [smem:[#allocation0]]
  $region22: #{actor_forward.1} parent=0
    _
  %s5 = ssub.s32 1, %s3
  %s6 = scalar_select 0, %s5, %s3
  $region1: #{actor_forward.1} parent=0
    #allocation2 [shape = 'u8[131072]{0}', space=vmem, size = 0x20000, scoped, tag = 'input window, operand 1, single buffered']
    #allocation3 [shape = 's32[1]{0}', space=sflag, size = 0x4, scoped, tag = 'scoped memory for actor_forward.1']
    %7 = vsyncpa [#allocation3], 0
    // Predicated region
    $region2: #{actor_forward.1} parent=1 // pred_check
      _
    $region3: #{actor_forward.1} parent=1 // pred_check_branch
      %9 = sbr.rel (0) target = $region5
    $region4: #{actor_forward.1} parent=1 // pred_region
      _
    $region5: #{actor_forward.1} parent=1 // pred_fallthru
      _
    // Predicated region
    $region6: #{actor_forward.1} parent=1 // pred_check
      _
    $region7: #{actor_forward.1} parent=1 // pred_check_branch
      %11 = sbr.rel (0) target = $region9
    $region8: #{actor_forward.1} parent=1 // pred_region
      %s13 = ssub.s32 4096, 4096
      %14 = vsyncadd [#allocation3], %s13
      %s15 = sshll.u32 [#allocation2], 4
      %s16 = int_to_ptr.vmem [resolvable:$true] %s15
      %21 = dma.hbm_to_vmem [thread:$0]  %s1, 4096, %s16, [#allocation3], 64, 64, 4
    $region9: #{actor_forward.1} parent=1 // pred_fallthru
      _
    // Predicated region
    $region10: #{actor_forward.1} parent=1 // pred_check
      _
    $region11: #{actor_forward.1} parent=1 // pred_check_branch
      %23 = sbr.rel (0) target = $region13
    $region12: #{actor_forward.1} parent=1 // pred_region
      %24 = dma.done [#allocation3], 4096
    $region13: #{actor_forward.1} parent=1 // pred_fallthru
      _
    %v26 = vlaneseq
    %v27 = vand.u32 %v26, 127
    %vm28 = vcmp.eq.s32.totalorder %v27, 5
    %v29 = vld [vmem:[%s0] sm:$0xff]
    %v30 = vld [vmem:[%s0 + $0x8] sm:$0xff]
    %v31 = vsel %vm28, 1.0, %v29
    %v32 = vsel %vm28, 1.0, %v30
    %v33 = vpack.c.bf16 %v32, %v31
    %v34 = vld [vmem:[#allocation2] sm:$0xf]
    %v35 = vld [vmem:[#allocation2 + $0x4] sm:$0xf]
    %v36 = vld [vmem:[#allocation2 + $0x8] sm:$0xf]
    %v37 = vld [vmem:[#allocation2 + $0xc] sm:$0xf]
    %v38 = vld [vmem:[#allocation2 + $0x10] sm:$0xf]
    %v39 = vld [vmem:[#allocation2 + $0x14] sm:$0xf]
    %v40 = vld [vmem:[#allocation2 + $0x18] sm:$0xf]
    %v41 = vld [vmem:[#allocation2 + $0x1c] sm:$0xf]
    %v42 = vld [vmem:[#allocation2 + $0x20] sm:$0xf]
    %v43 = vld [vmem:[#allocation2 + $0x24] sm:$0xf]
    %v44 = vld [vmem:[#allocation2 + $0x28] sm:$0xf]
    %v45 = vld [vmem:[#allocation2 + $0x2c] sm:$0xf]
    %v46 = vld [vmem:[#allocation2 + $0x30] sm:$0xf]
    %v47 = vld [vmem:[#allocation2 + $0x34] sm:$0xf]
    %v48 = vld [vmem:[#allocation2 + $0x38] sm:$0xf]
    %v49 = vld [vmem:[#allocation2 + $0x3c] sm:$0xf]
    %v66 = vunpack.c.l.b16 %v34
    %v67 = vunpack.c.l.b16 %v35
    %v68 = vunpack.c.l.b16 %v36
    %v69 = vunpack.c.l.b16 %v37
    %v70 = vunpack.c.l.b16 %v38
    %v71 = vunpack.c.l.b16 %v39
    %v72 = vunpack.c.l.b16 %v40
    %v73 = vunpack.c.l.b16 %v41
    %v74 = vunpack.c.l.b16 %v42
    %v75 = vunpack.c.l.b16 %v43
    %v76 = vunpack.c.l.b16 %v44
    %v77 = vunpack.c.l.b16 %v45
    %v78 = vunpack.c.l.b16 %v46
    %v79 = vunpack.c.l.b16 %v47
    %v80 = vunpack.c.l.b16 %v48
    %v81 = vunpack.c.l.b16 %v49
    %v82 = vpack.c.b16 %v67, %v66
    %v83 = vpack.c.b16 %v69, %v68
    %v84 = vpack.c.b16 %v71, %v70
    %v85 = vpack.c.b16 %v73, %v72
    %v86 = vpack.c.b16 %v75, %v74
    %v87 = vpack.c.b16 %v77, %v76
    %v88 = vpack.c.b16 %v79, %v78
    %v89 = vpack.c.b16 %v81, %v80
    %98 = vmatprep.subr.bf16.mxu0 0
    %99 = vmatpush1.bf16.msra.mxu0 %v82
    %100 = vmatprep.subr.bf16.mxu0 0
    %101 = vmatpush1.bf16.msra.mxu0 %v83
    %102 = vmatprep.subr.bf16.mxu0 0
    %103 = vmatpush1.bf16.msra.mxu0 %v84
    %104 = vmatprep.subr.bf16.mxu0 0
    %105 = vmatpush1.bf16.msra.mxu0 %v85
    %106 = vmatprep.subr.bf16.mxu0 0
    %107 = vmatpush1.bf16.msra.mxu0 %v86
    %108 = vmatprep.subr.bf16.mxu0 0
    %109 = vmatpush1.bf16.msra.mxu0 %v87
    %110 = vmatprep.subr.bf16.mxu0 0
    %111 = vmatpush1.bf16.msra.mxu0 %v88
    %112 = vmatprep.subr.bf16.mxu0 0
    %113 = vmatpush1.bf16.msra.mxu0 %v89
    %114 = vmatprep.subr.bf16.mxu0 0
    %115 = vmatpush1.bf16.msra.mxu0 0
    %116 = vmatprep.subr.bf16.mxu0 0
    %117 = vmatpush1.bf16.msra.mxu0 0
    %118 = vmatprep.subr.bf16.mxu0 0
    %119 = vmatpush1.bf16.msra.mxu0 0
    %120 = vmatprep.subr.bf16.mxu0 0
    %121 = vmatpush1.bf16.msra.mxu0 0
    %122 = vmatprep.subr.bf16.mxu0 0
    %123 = vmatpush1.bf16.msra.mxu0 0
    %124 = vmatprep.subr.bf16.mxu0 0
    %125 = vmatpush1.bf16.msra.mxu0 0
    %126 = vmatprep.subr.bf16.mxu0 0
    %127 = vmatpush1.bf16.msra.mxu0 0
    %128 = vmatprep.subr.bf16.mxu0 0
    %129 = vmatpush1.bf16.msra.mxu0 0
    %130 = vmatprep.mubr.bf16.mxu0 0
    %131 = vmatmul.mubr.bf16.gmra.mrb[0].mxu0 %v33
    %v132 = vpop.f32.mrb[0].mxu0
    %v133 = vadd.f32 0.0, %v132
    %v134 = vpop.f32.mrb[0].mxu0
    %v135 = vpop.f32.mrb[0].mxu0
    %v136 = vadd.f32 0.0, %v135
    %v137 = vpop.f32.mrb[0].mxu0
    %138 = vdwg.mxu0
    %v139 = vmax.f32 %v133, 0.0
    %v140 = vmax.f32 %v136, 0.0
    %v141 = vpack.c.bf16 %v140, %v139
    %v142 = vld [vmem:[#allocation2 + $0x40] sm:$0xf]
    %v143 = vld [vmem:[#allocation2 + $0x44] sm:$0xf]
    %v144 = vld [vmem:[#allocation2 + $0x48] sm:$0xf]
    %v145 = vld [vmem:[#allocation2 + $0x4c] sm:$0xf]
    %v146 = vld [vmem:[#allocation2 + $0x50] sm:$0xf]
    %v147 = vld [vmem:[#allocation2 + $0x54] sm:$0xf]
    %v148 = vld [vmem:[#allocation2 + $0x58] sm:$0xf]
    %v149 = vld [vmem:[#allocation2 + $0x5c] sm:$0xf]
    %v150 = vld [vmem:[#allocation2 + $0x60] sm:$0xf]
    %v151 = vld [vmem:[#allocation2 + $0x64] sm:$0xf]
    %v152 = vld [vmem:[#allocation2 + $0x68] sm:$0xf]
    %v153 = vld [vmem:[#allocation2 + $0x6c] sm:$0xf]
    %v154 = vld [vmem:[#allocation2 + $0x70] sm:$0xf]
    %v155 = vld [vmem:[#allocation2 + $0x74] sm:$0xf]
    %v156 = vld [vmem:[#allocation2 + $0x78] sm:$0xf]
    %v157 = vld [vmem:[#allocation2 + $0x7c] sm:$0xf]
    %v174 = vunpack.c.l.b16 %v142
    %v175 = vunpack.c.l.b16 %v143
    %v176 = vunpack.c.l.b16 %v144
    %v177 = vunpack.c.l.b16 %v145
    %v178 = vunpack.c.l.b16 %v146
    %v179 = vunpack.c.l.b16 %v147
    %v180 = vunpack.c.l.b16 %v148
    %v181 = vunpack.c.l.b16 %v149
    %v182 = vunpack.c.l.b16 %v150
    %v183 = vunpack.c.l.b16 %v151
    %v184 = vunpack.c.l.b16 %v152
    %v185 = vunpack.c.l.b16 %v153
    %v186 = vunpack.c.l.b16 %v154
    %v187 = vunpack.c.l.b16 %v155
    %v188 = vunpack.c.l.b16 %v156
    %v189 = vunpack.c.l.b16 %v157
    %v190 = vpack.c.b16 %v175, %v174
    %v191 = vpack.c.b16 %v177, %v176
    %v192 = vpack.c.b16 %v179, %v178
    %v193 = vpack.c.b16 %v181, %v180
    %v194 = vpack.c.b16 %v183, %v182
    %v195 = vpack.c.b16 %v185, %v184
    %v196 = vpack.c.b16 %v187, %v186
    %v197 = vpack.c.b16 %v189, %v188
    %206 = vmatprep.subr.bf16.mxu0 0
    %207 = vmatpush1.bf16.msra.mxu0 %v190
    %208 = vmatprep.subr.bf16.mxu0 0
    %209 = vmatpush1.bf16.msra.mxu0 %v191
    %210 = vmatprep.subr.bf16.mxu0 0
    %211 = vmatpush1.bf16.msra.mxu0 %v192
    %212 = vmatprep.subr.bf16.mxu0 0
    %213 = vmatpush1.bf16.msra.mxu0 %v193
    %214 = vmatprep.subr.bf16.mxu0 0
    %215 = vmatpush1.bf16.msra.mxu0 %v194
    %216 = vmatprep.subr.bf16.mxu0 0
    %217 = vmatpush1.bf16.msra.mxu0 %v195
    %218 = vmatprep.subr.bf16.mxu0 0
    %219 = vmatpush1.bf16.msra.mxu0 %v196
    %220 = vmatprep.subr.bf16.mxu0 0
    %221 = vmatpush1.bf16.msra.mxu0 %v197
    %222 = vmatprep.subr.bf16.mxu0 0
    %223 = vmatpush1.bf16.msra.mxu0 0
    %224 = vmatprep.subr.bf16.mxu0 0
    %225 = vmatpush1.bf16.msra.mxu0 0
    %226 = vmatprep.subr.bf16.mxu0 0
    %227 = vmatpush1.bf16.msra.mxu0 0
    %228 = vmatprep.subr.bf16.mxu0 0
    %229 = vmatpush1.bf16.msra.mxu0 0
    %230 = vmatprep.subr.bf16.mxu0 0
    %231 = vmatpush1.bf16.msra.mxu0 0
    %232 = vmatprep.subr.bf16.mxu0 0
    %233 = vmatpush1.bf16.msra.mxu0 0
    %234 = vmatprep.subr.bf16.mxu0 0
    %235 = vmatpush1.bf16.msra.mxu0 0
    %236 = vmatprep.subr.bf16.mxu0 0
    %237 = vmatpush1.bf16.msra.mxu0 0
    %238 = vmatprep.mubr.bf16.mxu0 0
    %239 = vmatmul.mubr.bf16.gmra.mrb[0].mxu0 %v141
    %v240 = vpop.f32.mrb[0].mxu0
    %v241 = vadd.f32 0.0, %v240
    %v242 = vpop.f32.mrb[0].mxu0
    %v243 = vpop.f32.mrb[0].mxu0
    %v244 = vadd.f32 0.0, %v243
    %v245 = vpop.f32.mrb[0].mxu0
    %246 = vdwg.mxu0
    %v247 = vmax.f32 %v241, 0.0
    %v248 = vmax.f32 %v244, 0.0
    %v249 = vpack.c.bf16 %v248, %v247
    %v250 = vld [vmem:[#allocation2 + $0x80] sm:$0xf]
    %v251 = vld [vmem:[#allocation2 + $0x84] sm:$0xf]
    %v252 = vld [vmem:[#allocation2 + $0x88] sm:$0xf]
    %v253 = vld [vmem:[#allocation2 + $0x8c] sm:$0xf]
    %v254 = vld [vmem:[#allocation2 + $0x90] sm:$0xf]
    %v255 = vld [vmem:[#allocation2 + $0x94] sm:$0xf]
    %v256 = vld [vmem:[#allocation2 + $0x98] sm:$0xf]
    %v257 = vld [vmem:[#allocation2 + $0x9c] sm:$0xf]
    %v258 = vld [vmem:[#allocation2 + $0xa0] sm:$0xf]
    %v259 = vld [vmem:[#allocation2 + $0xa4] sm:$0xf]
    %v260 = vld [vmem:[#allocation2 + $0xa8] sm:$0xf]
    %v261 = vld [vmem:[#allocation2 + $0xac] sm:$0xf]
    %v262 = vld [vmem:[#allocation2 + $0xb0] sm:$0xf]
    %v263 = vld [vmem:[#allocation2 + $0xb4] sm:$0xf]
    %v264 = vld [vmem:[#allocation2 + $0xb8] sm:$0xf]
    %v265 = vld [vmem:[#allocation2 + $0xbc] sm:$0xf]
    %v282 = vunpack.c.l.b16 %v250
    %v283 = vunpack.c.l.b16 %v251
    %v284 = vunpack.c.l.b16 %v252
    %v285 = vunpack.c.l.b16 %v253
    %v286 = vunpack.c.l.b16 %v254
    %v287 = vunpack.c.l.b16 %v255
    %v288 = vunpack.c.l.b16 %v256
    %v289 = vunpack.c.l.b16 %v257
    %v290 = vunpack.c.l.b16 %v258
    %v291 = vunpack.c.l.b16 %v259
    %v292 = vunpack.c.l.b16 %v260
    %v293 = vunpack.c.l.b16 %v261
    %v294 = vunpack.c.l.b16 %v262
    %v295 = vunpack.c.l.b16 %v263
    %v296 = vunpack.c.l.b16 %v264
    %v297 = vunpack.c.l.b16 %v265
    %v298 = vpack.c.b16 %v283, %v282
    %v299 = vpack.c.b16 %v285, %v284
    %v300 = vpack.c.b16 %v287, %v286
    %v301 = vpack.c.b16 %v289, %v288
    %v302 = vpack.c.b16 %v291, %v290
    %v303 = vpack.c.b16 %v293, %v292
    %v304 = vpack.c.b16 %v295, %v294
    %v305 = vpack.c.b16 %v297, %v296
    %314 = vmatprep.subr.bf16.mxu0 0
    %315 = vmatpush1.bf16.msra.mxu0 %v298
    %316 = vmatprep.subr.bf16.mxu0 0
    %317 = vmatpush1.bf16.msra.mxu0 %v299
    %318 = vmatprep.subr.bf16.mxu0 0
    %319 = vmatpush1.bf16.msra.mxu0 %v300
    %320 = vmatprep.subr.bf16.mxu0 0
    %321 = vmatpush1.bf16.msra.mxu0 %v301
    %322 = vmatprep.subr.bf16.mxu0 0
    %323 = vmatpush1.bf16.msra.mxu0 %v302
    %324 = vmatprep.subr.bf16.mxu0 0
    %325 = vmatpush1.bf16.msra.mxu0 %v303
    %326 = vmatprep.subr.bf16.mxu0 0
    %327 = vmatpush1.bf16.msra.mxu0 %v304
    %328 = vmatprep.subr.bf16.mxu0 0
    %329 = vmatpush1.bf16.msra.mxu0 %v305
    %330 = vmatprep.subr.bf16.mxu0 0
    %331 = vmatpush1.bf16.msra.mxu0 0
    %332 = vmatprep.subr.bf16.mxu0 0
    %333 = vmatpush1.bf16.msra.mxu0 0
    %334 = vmatprep.subr.bf16.mxu0 0
    %335 = vmatpush1.bf16.msra.mxu0 0
    %336 = vmatprep.subr.bf16.mxu0 0
    %337 = vmatpush1.bf16.msra.mxu0 0
    %338 = vmatprep.subr.bf16.mxu0 0
    %339 = vmatpush1.bf16.msra.mxu0 0
    %340 = vmatprep.subr.bf16.mxu0 0
    %341 = vmatpush1.bf16.msra.mxu0 0
    %342 = vmatprep.subr.bf16.mxu0 0
    %343 = vmatpush1.bf16.msra.mxu0 0
    %344 = vmatprep.subr.bf16.mxu0 0
    %345 = vmatpush1.bf16.msra.mxu0 0
    %346 = vmatprep.mubr.bf16.mxu0 0
    %347 = vmatmul.mubr.bf16.gmra.mrb[0].mxu0 %v249
    %v348 = vpop.f32.mrb[0].mxu0
    %v349 = vadd.f32 0.0, %v348
    %v350 = vpop.f32.mrb[0].mxu0
    %v351 = vpop.f32.mrb[0].mxu0
    %v352 = vadd.f32 0.0, %v351
    %v353 = vpop.f32.mrb[0].mxu0
    %354 = vdwg.mxu0
    %v355 = vmax.f32 %v349, 0.0
    %v356 = vmax.f32 %v352, 0.0
    %v357 = vpack.c.bf16 %v356, %v355
    %v358 = vld [vmem:[#allocation2 + $0xc0] sm:$0xf]
    %v359 = vld [vmem:[#allocation2 + $0xc4] sm:$0xf]
    %v360 = vld [vmem:[#allocation2 + $0xc8] sm:$0xf]
    %v361 = vld [vmem:[#allocation2 + $0xcc] sm:$0xf]
    %v362 = vld [vmem:[#allocation2 + $0xd0] sm:$0xf]
    %v363 = vld [vmem:[#allocation2 + $0xd4] sm:$0xf]
    %v364 = vld [vmem:[#allocation2 + $0xd8] sm:$0xf]
    %v365 = vld [vmem:[#allocation2 + $0xdc] sm:$0xf]
    %v366 = vld [vmem:[#allocation2 + $0xe0] sm:$0xf]
    %v367 = vld [vmem:[#allocation2 + $0xe4] sm:$0xf]
    %v368 = vld [vmem:[#allocation2 + $0xe8] sm:$0xf]
    %v369 = vld [vmem:[#allocation2 + $0xec] sm:$0xf]
    %v370 = vld [vmem:[#allocation2 + $0xf0] sm:$0xf]
    %v371 = vld [vmem:[#allocation2 + $0xf4] sm:$0xf]
    %v372 = vld [vmem:[#allocation2 + $0xf8] sm:$0xf]
    %v373 = vld [vmem:[#allocation2 + $0xfc] sm:$0xf]
    %v390 = vunpack.c.l.b16 %v358
    %v391 = vunpack.c.l.b16 %v359
    %v392 = vunpack.c.l.b16 %v360
    %v393 = vunpack.c.l.b16 %v361
    %v394 = vunpack.c.l.b16 %v362
    %v395 = vunpack.c.l.b16 %v363
    %v396 = vunpack.c.l.b16 %v364
    %v397 = vunpack.c.l.b16 %v365
    %v398 = vunpack.c.l.b16 %v366
    %v399 = vunpack.c.l.b16 %v367
    %v400 = vunpack.c.l.b16 %v368
    %v401 = vunpack.c.l.b16 %v369
    %v402 = vunpack.c.l.b16 %v370
    %v403 = vunpack.c.l.b16 %v371
    %v404 = vunpack.c.l.b16 %v372
    %v405 = vunpack.c.l.b16 %v373
    %v406 = vpack.c.b16 %v391, %v390
    %v407 = vpack.c.b16 %v393, %v392
    %v408 = vpack.c.b16 %v395, %v394
    %v409 = vpack.c.b16 %v397, %v396
    %v410 = vpack.c.b16 %v399, %v398
    %v411 = vpack.c.b16 %v401, %v400
    %v412 = vpack.c.b16 %v403, %v402
    %v413 = vpack.c.b16 %v405, %v404
    %422 = vmatprep.subr.bf16.mxu0 0
    %423 = vmatpush1.bf16.msra.mxu0 %v406
    %424 = vmatprep.subr.bf16.mxu0 0
    %425 = vmatpush1.bf16.msra.mxu0 %v407
    %426 = vmatprep.subr.bf16.mxu0 0
    %427 = vmatpush1.bf16.msra.mxu0 %v408
    %428 = vmatprep.subr.bf16.mxu0 0
    %429 = vmatpush1.bf16.msra.mxu0 %v409
    %430 = vmatprep.subr.bf16.mxu0 0
    %431 = vmatpush1.bf16.msra.mxu0 %v410
    %432 = vmatprep.subr.bf16.mxu0 0
    %433 = vmatpush1.bf16.msra.mxu0 %v411
    %434 = vmatprep.subr.bf16.mxu0 0
    %435 = vmatpush1.bf16.msra.mxu0 %v412
    %436 = vmatprep.subr.bf16.mxu0 0
    %437 = vmatpush1.bf16.msra.mxu0 %v413
    %438 = vmatprep.subr.bf16.mxu0 0
    %439 = vmatpush1.bf16.msra.mxu0 0
    %440 = vmatprep.subr.bf16.mxu0 0
    %441 = vmatpush1.bf16.msra.mxu0 0
    %442 = vmatprep.subr.bf16.mxu0 0
    %443 = vmatpush1.bf16.msra.mxu0 0
    %444 = vmatprep.subr.bf16.mxu0 0
    %445 = vmatpush1.bf16.msra.mxu0 0
    %446 = vmatprep.subr.bf16.mxu0 0
    %447 = vmatpush1.bf16.msra.mxu0 0
    %448 = vmatprep.subr.bf16.mxu0 0
    %449 = vmatpush1.bf16.msra.mxu0 0
    %450 = vmatprep.subr.bf16.mxu0 0
    %451 = vmatpush1.bf16.msra.mxu0 0
    %452 = vmatprep.subr.bf16.mxu0 0
    %453 = vmatpush1.bf16.msra.mxu0 0
    %454 = vmatprep.mubr.bf16.mxu0 0
    %455 = vmatmul.mubr.bf16.gmra.mrb[0].mxu0 %v357
    %v456 = vpop.f32.mrb[0].mxu0
    %v457 = vadd.f32 0.0, %v456
    %v458 = vpop.f32.mrb[0].mxu0
    %v459 = vpop.f32.mrb[0].mxu0
    %v460 = vadd.f32 0.0, %v459
    %v461 = vpop.f32.mrb[0].mxu0
    %462 = vdwg.mxu0
    %v463 = vtanh.pop %v457
    %v464 = vtanh.pop %v460
    %v465 = vadd.f32 %v463, 1.0
    %v466 = vadd.f32 %v464, 1.0
    %v467 = vmul.f32 %v465, 2.5
    %v468 = vmul.f32 %v466, 2.5
    %vm469 = vcmp.lt.s32.totalorder %v27, 5
    %v470 = vsel %vm469, %v467, -1.0
    %v471 = vsel %vm469, %v468, -1.0
    %472 = vmax.xlane.f32.xlu0 %v470
    %v473 = vpop.xlane.xlu0 %472
    %474 = vmax.xlane.f32.xlu0 %v471
    %v475 = vpop.xlane.xlu0 %474
    %vm476 = vcmp.eq.f32.partialorder %v467, %v473
    %vm477 = vcmp.eq.f32.partialorder %v468, %v475
    %vm478 = vmand %vm469, %vm476
    %vm479 = vmand %vm469, %vm477
    %v480 = vsel %vm478, %v27, 128
    %v481 = vsel %vm479, %v27, 128
    %v482 = vand.u32 %v480, 65535
    %v483 = vshra.s32 %v480, 16
    %v484 = vcvt.s32.f32 %v482
    %v485 = vcvt.s32.f32 %v483
    %486 = vmin.xlane.f32.xlu0 %v485
    %v487 = vpop.xlane.xlu0 %486
    %vm488 = vcmp.eq.f32.partialorder %v485, %v487
    %v489 = vsel %vm488, %v484, inf
    %490 = vmin.xlane.f32.xlu0 %v489
    %v491 = vpop.xlane.xlu0 %490
    %v492 = vcvt.f32.s32 %v491
    %v493 = vcvt.f32.s32 %v487
    %v494 = vshll.u32 %v493, 16
    %v495 = vadd.s32 %v494, %v492
    %v496 = vand.u32 %v481, 65535
    %v497 = vshra.s32 %v481, 16
    %v498 = vcvt.s32.f32 %v496
    %v499 = vcvt.s32.f32 %v497
    %500 = vmin.xlane.f32.xlu0 %v499
    %v501 = vpop.xlane.xlu0 %500
    %vm502 = vcmp.eq.f32.partialorder %v499, %v501
    %v503 = vsel %vm502, %v498, inf
    %504 = vmin.xlane.f32.xlu0 %v503
    %v505 = vpop.xlane.xlu0 %504
    %v506 = vcvt.f32.s32 %v505
    %v507 = vcvt.f32.s32 %v501
    %v508 = vshll.u32 %v507, 16
    %v509 = vadd.s32 %v508, %v506
    %vm510 = vcmp.eq.s32.totalorder %v27, %v495
    %vm511 = vcmp.eq.s32.totalorder %v27, %v509
    %v512 = vsel %vm510, %v467, 0.0
    %v513 = vsel %vm511, %v468, 0.0
    %514 = vst [vmem:[%s2] sm:$0xff] %v512
    %515 = vst [vmem:[%s2 + $0x8] sm:$0xff] %v513
    // Predicated region
    $region14: #{actor_forward.1} parent=1 // pred_check
      _
    $region15: #{actor_forward.1} parent=1 // pred_check_branch
      %517 = sbr.rel (0) target = $region17
    $region16: #{actor_forward.1} parent=1 // pred_region
      _
    $region17: #{actor_forward.1} parent=1 // pred_fallthru
      _
    // Predicated region
    $region18: #{actor_forward.1} parent=1 // pred_check
      _
    $region19: #{actor_forward.1} parent=1 // pred_check_branch
      %519 = sbr.rel (0) target = $region21
    $region20: #{actor_forward.1} parent=1 // pred_region
      _
    $region21: #{actor_forward.1} parent=1 // pred_fallthru
      _
    %520 = vsyncpa [#allocation3], 1

</llo_original>
